<compile_context>
chip_gen: v7x
topology: tpu7x:2x2x1
jax: 0.10.0
libtpu: 0.0.40
codegen_flags: <defaults>
</compile_context>

<pallas_src>
import jax
import jax.numpy as jnp
from jax.experimental import pallas as pl
from jax.experimental.pallas import tpu as pltpu

_LANE = 128


def _make_kernel(s_true: int):
    def attention_head_kernel(x_ref, w_ref, bw_ref, vrow_ref, o_ref):
        # x_ref   : (tb, S_pad, F)   feature block (f32 or bf16)
        # w_ref   : (F, H)           linear weight (f32 or bf16)
        # bw_ref  : (1, H)           f32
        # vrow_ref: (1, H)           V stored as a lane row, f32
        # o_ref   : (tb, F)          f32 context vectors
        tb, s_pad, f = x_ref.shape

        x = x_ref[...]
        # Free re-view: S_pad is a multiple of the sublane tile (8 / 16), so
        # (tb, S_pad, F) and (tb*S_pad, F) share the same VMEM tiling.
        x2 = x.reshape(tb * s_pad, f)

        # One big (tb*S_pad, F) @ (F, H) MXU matmul with f32 accumulation.
        att = jnp.tanh(
            jnp.dot(x2, w_ref[...], preferred_element_type=jnp.float32)
            + bw_ref[...]
        )                                                    # (tb*S_pad, H)

        # score = att @ V as a VPU multiply + XLU lane reduce (V is a single
        # column; an N=1 MXU matmul would waste the array).  bV is omitted:
        # softmax(score + c) == softmax(score).
        score = jnp.sum(att * vrow_ref[...], axis=-1, keepdims=True)
        score = score.reshape(tb, s_pad, 1)                  # free re-view

        if s_pad != s_true:
            # Padded sequence positions must not receive attention mass.
            pos = jax.lax.broadcasted_iota(jnp.int32, (tb, s_pad, 1), 1)
            score = jnp.where(pos < s_true, score, jnp.float32(-1e30))

        # Per-batch softmax over the sequence axis.  Exact division: it is
        # negligible next to the feature DMA and keeps f32-tight numerics.
        m = jnp.max(score, axis=1, keepdims=True)            # (tb, 1, 1)
        e = jnp.exp(score - m)                               # (tb, S_pad, 1)
        denom = jnp.sum(e, axis=1, keepdims=True)            # (tb, 1, 1)
        attn = e / denom

        # context = sum_s attn * features (upcast bf16 features for the sum).
        ctx = jnp.sum(attn * x.astype(jnp.float32), axis=1)  # (tb, F)
        o_ref[...] = ctx.astype(o_ref.dtype)

    return attention_head_kernel


def _vmem_capacity_bytes() -> int:
    """Physical per-TensorCore VMEM; falls back to the v7x minimum (64 MiB)."""
    try:
        info = pltpu.get_tpu_info()
        cap = getattr(info, "vmem_capacity_bytes", None)
        if cap:
            return int(cap)
    except Exception:
        pass
    return 64 * 2 ** 20


def _choose_batch_tiling(B, S_pad, F, H, in_itemsize, vmem_budget, target_bytes):
    """Pick (tb, num_steps): batch elements per grid step and grid length."""
    f_cols = pl.cdiv(F, _LANE) * _LANE          # VMEM lane padding of narrow dims
    h_cols = pl.cdiv(H, _LANE) * _LANE
    # Conservative per-batch-element VMEM footprint of the live per-step
    # arrays: double-buffered feature block, f32 copy for the ctx reduction,
    # and the att intermediate (all lane-padded to 128).
    per_b_vmem = S_pad * (2 * f_cols * in_itemsize + f_cols * 4 + h_cols * 4)
    per_b_hbm = S_pad * F * in_itemsize

    tb_cap = min(max(1, vmem_budget // per_b_vmem),
                 max(1, target_bytes // per_b_hbm))
    num_steps = pl.cdiv(B, tb_cap)
    if B > 1:
        # At least two grid steps so the "parallel" batch axis can be split
        # across the two TensorCores of a v7x chip (no effect on v5e/v6e).
        num_steps = max(num_steps, 2)
    tb = pl.cdiv(B, num_steps)
    if num_steps > 1:
        # The (tb, F) output block needs a sublane-aligned leading dim.
        # TODO(synk): for huge S_pad*F this 8-row minimum can exceed the VMEM
        # budget; the proper fix is the extra "arbitrary" S grid axis above.
        tb = pl.cdiv(tb, 8) * 8
    return tb, num_steps


def attention_head(features, w, bw, v, bv=None, *,
                   use_bf16_transport=False, target_block_bytes=2 * 2 ** 20):
    """features (B, S, F) f32 -> context vector (B, F); matches AttentionHead."""
    out_dtype = features.dtype
    B, S, F = features.shape
    H = w.shape[1]
    del bv  # Softmax is shift-invariant: V's bias cannot affect the output.

    in_dtype = jnp.bfloat16 if use_bf16_transport else features.dtype
    itemsize = jnp.dtype(in_dtype).itemsize
    sub_s = 16 if in_dtype == jnp.bfloat16 else 8

    if use_bf16_transport:
        # Cast at the wrapper so the DMA itself moves half the bytes.
        features = features.astype(jnp.bfloat16)
        w = w.astype(jnp.bfloat16)

    # Pad S to a sublane multiple so the in-kernel flatten is a free re-view;
    # padded positions are masked inside the kernel.
    S_pad = pl.cdiv(S, sub_s) * sub_s
    if S_pad != S:
        features = jnp.pad(features, ((0, 0), (0, S_pad - S), (0, 0)))

    # Per-generation VMEM budget: never request all of a v7x TC's 64 MiB.
    vmem_cap = _vmem_capacity_bytes()
    vmem_ceiling = min(int(0.70 * vmem_cap), 44 * 2 ** 20)

    tb, num_steps = _choose_batch_tiling(
        B, S_pad, F, H, itemsize,
        vmem_budget=vmem_ceiling // 2, target_bytes=target_block_bytes)

    Bp = tb * num_steps
    if Bp != B:
        # Zero-padded batch rows are harmless (uniform softmax over zero rows
        # gives a zero context vector) and are sliced off below.
        features = jnp.pad(features, ((0, Bp - B), (0, 0), (0, 0)))

    bw2 = bw.reshape(1, H).astype(jnp.float32)
    vrow = v.reshape(1, H).astype(jnp.float32)   # V as a (1, H) lane row

    # Explicit VMEM limit sized from the actual blocks (lane padding + double
    # buffering), capped by the per-generation ceiling.
    f_cols = pl.cdiv(F, _LANE) * _LANE
    h_cols = pl.cdiv(H, _LANE) * _LANE
    block_vmem = (tb * S_pad * (2 * f_cols * itemsize + f_cols * 4 + h_cols * 4)
                  + f_cols * h_cols * itemsize + 2 * h_cols * 4
                  + 2 * tb * f_cols * 4)
    vmem_limit = int(min(vmem_ceiling, max(16 * 2 ** 20, 2 * block_vmem)))

    cost = pl.CostEstimate(
        flops=int(2 * Bp * S_pad * H * (F + 1) + 2 * Bp * S_pad * F),
        transcendentals=int(Bp * S_pad * (H + 1)),
        bytes_accessed=int(Bp * S_pad * F * itemsize + Bp * F * 4
                           + F * H * itemsize + 2 * H * 4),
    )

    out = pl.pallas_call(
        _make_kernel(S),
        out_shape=jax.ShapeDtypeStruct((Bp, F), jnp.float32),
        grid_spec=pltpu.PrefetchScalarGridSpec(
            num_scalar_prefetch=0,
            grid=(num_steps,),
            in_specs=[
                pl.BlockSpec((tb, S_pad, F), lambda b: (b, 0, 0)),  # features
                pl.BlockSpec((F, H), lambda b: (0, 0)),             # W
                pl.BlockSpec((1, H), lambda b: (0, 0)),             # bW
                pl.BlockSpec((1, H), lambda b: (0, 0)),             # V row
            ],
            out_specs=pl.BlockSpec((tb, F), lambda b: (b, 0)),
        ),
        compiler_params=pltpu.CompilerParams(
            dimension_semantics=("parallel",),
            vmem_limit_bytes=vmem_limit,
        ),
        cost_estimate=cost,
    )(features, w, bw2, vrow)

    return out[:B].astype(out_dtype)


def attention_head_ref(features, w, bw, v, bv):
    """Pure-JAX reference matching the PyTorch module (high-precision matmuls)."""
    att = jnp.tanh(
        jnp.matmul(features, w, precision=jax.lax.Precision.HIGHEST) + bw)
    score = jnp.matmul(att, v, precision=jax.lax.Precision.HIGHEST) + bv
    attn = jax.nn.softmax(score, axis=1)
    return jnp.sum(attn * features, axis=1)


if __name__ == "__main__":
    B, S, F, H = 2, 8, 32, 32  # batch, seq, in_features, hidden_dim

    key = jax.random.PRNGKey(0)
    kx, kw, kbw, kv, kbv = jax.random.split(key, 5)

    features = jax.random.normal(kx, (B, S, F), dtype=jnp.float32)
    # Deterministic synthetic "Linear" parameters.
    w = jax.random.normal(kw, (F, H), dtype=jnp.float32) * (F ** -0.5)
    bw = jax.random.normal(kbw, (H,), dtype=jnp.float32) * 0.01
    v = jax.random.normal(kv, (H, 1), dtype=jnp.float32) * (H ** -0.5)
    bv = jax.random.normal(kbv, (1,), dtype=jnp.float32) * 0.01

    out = jax.block_until_ready(attention_head(features, w, bw, v, bv))
    ref = attention_head_ref(features, w, bw, v, bv)

    assert out.shape == (B, F)
    max_err = float(jnp.max(jnp.abs(out - ref)))
    # Exact softmax division in the kernel; the remaining tolerance budget
    # only covers MXU f32 pass-count differences between Mosaic and XLA.
    assert jnp.allclose(out, ref, atol=2e-3, rtol=2e-3), (
        f"mismatch: max abs err {max_err}")
    print("KERNEL_OK")
</pallas_src>

<mosaic_0001>
module attributes {stable_mosaic.version = 11 : i64} {
  func.func @attention_head_kernel(%arg0: i32, %arg1: memref<8x8x32xf32, #tpu.memory_space<vmem>>, %arg2: memref<32x32xf32, #tpu.memory_space<vmem>>, %arg3: memref<1x32xf32, #tpu.memory_space<vmem>>, %arg4: memref<1x32xf32, #tpu.memory_space<vmem>>, %arg5: memref<8x32xf32, #tpu.memory_space<vmem>>) attributes {dimension_semantics = [#tpu.dimension_semantics<parallel>], iteration_bounds = array<i64: 2>, scalar_prefetch = 0 : i64, scratch_operands = 0 : i64, tpu.core_type = #tpu.core_type<tc>, window_params = [{transform_indices = @transform_0, window_bounds = array<i64: 8, 8, 32>}, {pipeline_mode = #tpu.pipeline_mode<synchronous>, transform_indices = @transform_1, window_bounds = array<i64: 32, 32>}, {pipeline_mode = #tpu.pipeline_mode<synchronous>, transform_indices = @transform_2, window_bounds = array<i64: 1, 32>}, {pipeline_mode = #tpu.pipeline_mode<synchronous>, transform_indices = @transform_3, window_bounds = array<i64: 1, 32>}, {transform_indices = @transform_4, window_bounds = array<i64: 8, 32>}]} {
    %c0 = arith.constant 0 : index
    %c0_0 = arith.constant 0 : index
    %c0_1 = arith.constant 0 : index
    %0 = vector.load %arg1[%c0, %c0_0, %c0_1] : memref<8x8x32xf32, #tpu.memory_space<vmem>>, vector<8x8x32xf32>
    %1 = vector.shape_cast %0 : vector<8x8x32xf32> to vector<64x32xf32>
    %c0_2 = arith.constant 0 : index
    %c0_3 = arith.constant 0 : index
    %2 = vector.load %arg2[%c0_2, %c0_3] : memref<32x32xf32, #tpu.memory_space<vmem>>, vector<32x32xf32>
    %cst = arith.constant dense<0.000000e+00> : vector<64x32xf32>
    %3 = tpu.matmul %1, %2, %cst {dimension_numbers = #tpu.dot_dimension_numbers<[1], [0], [0], [1], [0, 0, 1, 1], [], []>} : vector<64x32xf32>, vector<32x32xf32>, vector<64x32xf32> -> vector<64x32xf32>
    %c0_4 = arith.constant 0 : index
    %c0_5 = arith.constant 0 : index
    %4 = vector.load %arg3[%c0_4, %c0_5] : memref<1x32xf32, #tpu.memory_space<vmem>>, vector<1x32xf32>
    %5 = vector.broadcast %4 : vector<1x32xf32> to vector<64x32xf32>
    %6 = arith.addf %3, %5 : vector<64x32xf32>
    %7 = math.tanh %6 : vector<64x32xf32>
    %c0_6 = arith.constant 0 : index
    %c0_7 = arith.constant 0 : index
    %8 = vector.load %arg4[%c0_6, %c0_7] : memref<1x32xf32, #tpu.memory_space<vmem>>, vector<1x32xf32>
    %9 = vector.broadcast %8 : vector<1x32xf32> to vector<64x32xf32>
    %10 = arith.mulf %7, %9 : vector<64x32xf32>
    %cst_8 = arith.constant dense<0.000000e+00> : vector<64xf32>
    %11 = vector.multi_reduction <add>, %10, %cst_8 [1] : vector<64x32xf32> to vector<64xf32>
    %12 = vector.shape_cast %11 : vector<64xf32> to vector<64x1xf32>
    %13 = vector.shape_cast %12 : vector<64x1xf32> to vector<8x8x1xf32>
    %cst_9 = arith.constant dense<0xFF800000> : vector<8x1xf32>
    %14 = vector.multi_reduction <maximumf>, %13, %cst_9 [1] : vector<8x8x1xf32> to vector<8x1xf32>
    %15 = vector.shape_cast %14 : vector<8x1xf32> to vector<8x1x1xf32>
    %16 = vector.broadcast %15 : vector<8x1x1xf32> to vector<8x8x1xf32>
    %17 = arith.subf %13, %16 : vector<8x8x1xf32>
    %18 = math.exp %17 : vector<8x8x1xf32>
    %cst_10 = arith.constant dense<0.000000e+00> : vector<8x1xf32>
    %19 = vector.multi_reduction <add>, %18, %cst_10 [1] : vector<8x8x1xf32> to vector<8x1xf32>
    %20 = vector.shape_cast %19 : vector<8x1xf32> to vector<8x1x1xf32>
    %21 = vector.broadcast %20 : vector<8x1x1xf32> to vector<8x8x1xf32>
    %22 = arith.divf %18, %21 : vector<8x8x1xf32>
    %23 = vector.broadcast %22 : vector<8x8x1xf32> to vector<8x8x32xf32>
    %24 = arith.mulf %23, %0 : vector<8x8x32xf32>
    %cst_11 = arith.constant dense<0.000000e+00> : vector<8x32xf32>
    %25 = vector.multi_reduction <add>, %24, %cst_11 [1] : vector<8x8x32xf32> to vector<8x32xf32>
    %c0_12 = arith.constant 0 : index
    %c0_13 = arith.constant 0 : index
    %26 = vector.load %arg5[%c0_12, %c0_13] : memref<8x32xf32, #tpu.memory_space<vmem>>, vector<8x32xf32>
    tpu.vector_store %arg5[%c0_12, %c0_13], %25 {strides = array<i32>} : memref<8x32xf32, #tpu.memory_space<vmem>>, vector<8x32xf32>,
    return
  }
  func.func @transform_0(%arg0: i32) -> (i32, i32, i32) {
    %c0_i32 = arith.constant 0 : i32
    %c0_i32_0 = arith.constant 0 : i32
    %c0_i32_1 = arith.constant 0 : i32
    return %arg0, %c0_i32, %c0_i32_0 : i32, i32, i32
  }
  func.func @transform_1(%arg0: i32) -> (i32, i32) {
    %c0_i32 = arith.constant 0 : i32
    %c0_i32_0 = arith.constant 0 : i32
    %c0_i32_1 = arith.constant 0 : i32
    return %c0_i32, %c0_i32_0 : i32, i32
  }
  func.func @transform_2(%arg0: i32) -> (i32, i32) {
    %c0_i32 = arith.constant 0 : i32
    %c0_i32_0 = arith.constant 0 : i32
    %c0_i32_1 = arith.constant 0 : i32
    return %c0_i32, %c0_i32_0 : i32, i32
  }
  func.func @transform_3(%arg0: i32) -> (i32, i32) {
    %c0_i32 = arith.constant 0 : i32
    %c0_i32_0 = arith.constant 0 : i32
    %c0_i32_1 = arith.constant 0 : i32
    return %c0_i32, %c0_i32_0 : i32, i32
  }
  func.func @transform_4(%arg0: i32) -> (i32, i32) {
    %c0_i32 = arith.constant 0 : i32
    %c0_i32_0 = arith.constant 0 : i32
    return %arg0, %c0_i32 : i32, i32
  }
}

</mosaic_0001>

<llo_original>
// kernel: tpu_custom_call.1
$region0: #{tpu_custom_call.1}
  #allocation0 [shape = 'u32[]', space=smem, size = 0x4, offset = 0x4, fixed_abs, tag = 'smem constant byte address 0x4 - core index']
  #allocation1 [shape = 'u32[144,128]{1,0:T(1,128)}', space=vmem, size = 0x12000, scoped, tag = 'internal scratch']
  %s0 = inlined_call_operand.hbm [shape: f32[16,8,32], index: 0, kind: input, shape index: {}]
  %s1 = inlined_call_operand.hbm [shape: f32[32,32], index: 1, kind: input, shape index: {}]
  %s2 = inlined_call_operand.vmem [shape: f32[1,32], index: 2, kind: input, shape index: {}]
  %s3 = inlined_call_operand.vmem [shape: f32[1,32], index: 3, kind: input, shape index: {}]
  %s4 = inlined_call_operand.hbm [shape: f32[16,32], index: 4, kind: output, shape index: {}]
  %s5 = sld [smem:[#allocation0]]
  $region57: #{tpu_custom_call.1} parent=0
    _
  %s7 = ssub.s32 1, %s5
  %s8 = scalar_select 0, %s7, %s5
  $region1: #{tpu_custom_call.1} parent=0
    #allocation2 [shape = 'u8[65536]{0}', space=vmem, size = 0x10000, scoped, tag = 'input window, operand 0']
    #allocation3 [shape = 's32[2]{0}', space=sflag, size = 0x8, scoped, tag = 'scoped memory for tpu_custom_call.1']
    #allocation4 [shape = 's32[2]{0}', space=sflag, size = 0x8, scoped, tag = 'scoped memory for tpu_custom_call.1']
    #allocation5 [shape = 'u8[16384]{0}', space=vmem, size = 0x4000, scoped, tag = 'input window, operand 1, single buffered']
    #allocation6 [shape = 's32[1]{0}', space=sflag, size = 0x4, scoped, tag = 'scoped memory for tpu_custom_call.1']
    #allocation7 [shape = 'u8[8192]{0}', space=vmem, size = 0x2000, scoped, tag = 'output window, operand 0']
    %9 = vsyncpa [#allocation3], 0
    %s10 = scalar_lea.sflag [#allocation3], 1
    %11 = vsyncpa %s10, 0
    %12 = vsyncpa [#allocation6], 0
    %13 = vsyncpa [#allocation4], 0
    %s14 = scalar_lea.sflag [#allocation4], 1
    %15 = vsyncpa %s14, 0
    loop: start=0, step=1, limit=4
    $region2: #{tpu_custom_call.1} parent=1 // loop_pre_header
      _
    $region3: #{tpu_custom_call.1} parent=1 // loop_header
      %s17 = sphi 0, %s21
      %p18 = scmp.ge.s32.totalorder %s17, 4
      %s27 = sphi 0, %s29
      %s30 = sphi 0, %s27
      %s31 = sphi 0, %s30
      %s47 = sphi 0, %s31
      %s51 = sphi 0, %s51
      %s53 = sphi 0, %s51
      %s54 = sphi 0, %s53
      %s68 = sphi 0, %s54
      %s72 = sphi 0, %s72
      %s74 = sphi 0, %s72
      %s75 = sphi 0, %s74
      %s89 = sphi 0, %s75
      %s93 = sphi 0, %s93
      %s95 = sphi 0, %s93
      %s96 = sphi 0, %s95
      %s110 = sphi 0, %s96
      %s116 = sphi 0, %s118
      %s119 = sphi 0, %s116
      %s120 = sphi 0, %s119
      %s136 = sphi 0, %s120
    $region4: #{tpu_custom_call.1} parent=1 // loop_header_branch
      %20 = sbr.rel (%p18) target = $region8
    $region5: #{tpu_custom_call.1} parent=1 // loop_body
      %s22 = ssub.s32 %s17, 1
      %s23 = ssub.s32 %s17, 2
      %s24 = sadd.s32 %s17, 1
      %s25 = ssub.s32 %s17, %s24
      %p26 = scmp.eq.s32.totalorder %s25, 0
      %s28 = sadd.s32 %s27, 1
      %s29 = scalar_select %p26, %s27, %s28
      %p32 = pneg %p26
      %p33 = scmp.eq.s32.totalorder %s17, 1
      %p34 = por %p32, %p33
      %p35 = scmp.ne.s32.totalorder %s27, %s30
      %p36 = scmp.eq.s32.totalorder %s17, 0
      %p37 = por %p35, %p36
      %p38 = scmp.ne.s32.totalorder %s27, %s30
      %p39 = scmp.eq.s32.totalorder %s22, 1
      %p40 = por %p38, %p39
      %p41 = scmp.ne.s32.totalorder %s30, %s31
      %p42 = scmp.eq.s32.totalorder %s22, 0
      %p43 = por %p41, %p42
      %p44 = scmp.ne.s32.totalorder %s30, %s31
      %p45 = scmp.eq.s32.totalorder %s23, 1
      %p46 = por %p44, %p45
      %p48 = scmp.ne.s32.totalorder %s31, %s47
      %p49 = scmp.eq.s32.totalorder %s23, 0
      %p50 = por %p48, %p49
      %s52 = sadd.s32 %s51, 1
      %p55 = scmp.eq.s32.totalorder %s17, 1
      %p56 = scmp.ne.s32.totalorder %s51, %s53
      %p57 = scmp.eq.s32.totalorder %s17, 0
      %p58 = por %p56, %p57
      %p59 = scmp.ne.s32.totalorder %s51, %s53
      %p60 = scmp.eq.s32.totalorder %s22, 1
      %p61 = por %p59, %p60
      %p62 = scmp.ne.s32.totalorder %s53, %s54
      %p63 = scmp.eq.s32.totalorder %s22, 0
      %p64 = por %p62, %p63
      %p65 = scmp.ne.s32.totalorder %s53, %s54
      %p66 = scmp.eq.s32.totalorder %s23, 1
      %p67 = por %p65, %p66
      %p69 = scmp.ne.s32.totalorder %s54, %s68
      %p70 = scmp.eq.s32.totalorder %s23, 0
      %p71 = por %p69, %p70
      %s73 = sadd.s32 %s72, 1
      %p76 = scmp.eq.s32.totalorder %s17, 1
      %p77 = scmp.ne.s32.totalorder %s72, %s74
      %p78 = scmp.eq.s32.totalorder %s17, 0
      %p79 = por %p77, %p78
      %p80 = scmp.ne.s32.totalorder %s72, %s74
      %p81 = scmp.eq.s32.totalorder %s22, 1
      %p82 = por %p80, %p81
      %p83 = scmp.ne.s32.totalorder %s74, %s75
      %p84 = scmp.eq.s32.totalorder %s22, 0
      %p85 = por %p83, %p84
      %p86 = scmp.ne.s32.totalorder %s74, %s75
      %p87 = scmp.eq.s32.totalorder %s23, 1
      %p88 = por %p86, %p87
      %p90 = scmp.ne.s32.totalorder %s75, %s89
      %p91 = scmp.eq.s32.totalorder %s23, 0
      %p92 = por %p90, %p91
      %s94 = sadd.s32 %s93, 1
      %p97 = scmp.eq.s32.totalorder %s17, 1
      %p98 = scmp.ne.s32.totalorder %s93, %s95
      %p99 = scmp.eq.s32.totalorder %s17, 0
      %p100 = por %p98, %p99
      %p101 = scmp.ne.s32.totalorder %s93, %s95
      %p102 = scmp.eq.s32.totalorder %s22, 1
      %p103 = por %p101, %p102
      %p104 = scmp.ne.s32.totalorder %s95, %s96
      %p105 = scmp.eq.s32.totalorder %s22, 0
      %p106 = por %p104, %p105
      %p107 = scmp.ne.s32.totalorder %s95, %s96
      %p108 = scmp.eq.s32.totalorder %s23, 1
      %p109 = por %p107, %p108
      %p111 = scmp.ne.s32.totalorder %s96, %s110
      %p112 = scmp.eq.s32.totalorder %s23, 0
      %p113 = por %p111, %p112
      %s114 = ssub.s32 %s17, %s24
      %p115 = scmp.eq.s32.totalorder %s114, 0
      %s117 = sadd.s32 %s116, 1
      %s118 = scalar_select %p115, %s116, %s117
      %p121 = pneg %p115
      %p122 = scmp.eq.s32.totalorder %s17, 1
      %p123 = por %p121, %p122
      %p124 = scmp.ne.s32.totalorder %s116, %s119
      %p125 = scmp.eq.s32.totalorder %s17, 0
      %p126 = por %p124, %p125
      %p127 = scmp.ne.s32.totalorder %s116, %s119
      %p128 = scmp.eq.s32.totalorder %s22, 1
      %p129 = por %p127, %p128
      %p130 = scmp.ne.s32.totalorder %s119, %s120
      %p131 = scmp.eq.s32.totalorder %s22, 0
      %p132 = por %p130, %p131
      %p133 = scmp.ne.s32.totalorder %s119, %s120
      %p134 = scmp.eq.s32.totalorder %s23, 1
      %p135 = por %p133, %p134
      %p137 = scmp.ne.s32.totalorder %s120, %s136
      %p138 = scmp.eq.s32.totalorder %s23, 0
      %p139 = por %p137, %p138
      %p140 = scmp.le.s32.totalorder 1, %s17
      %p141 = scmp.lt.s32.totalorder %s17, 3
      %p142 = pnand %p140, %p141
      %p143 = pneg %p142
      // Predicated region
      $region9: #{tpu_custom_call.1} parent=5 // pred_check
        _
      $region10: #{tpu_custom_call.1} parent=5 // pred_check_branch
        %145 = sbr.rel (%p142) target = $region12
      $region11: #{tpu_custom_call.1} parent=5 // pred_region
        %s146 = ssub.s32 %s17, 1
        // Predicated region
        $region13: #{tpu_custom_call.1} parent=11 // pred_check
          %p147 = pneg %p64
        $region14: #{tpu_custom_call.1} parent=11 // pred_check_branch
          %149 = sbr.rel (%p147) target = $region16
        $region15: #{tpu_custom_call.1} parent=11 // pred_region
          %s151 = ssub.s32 512, 512
          %152 = vsyncadd [#allocation6], %s151
          %s153 = sshll.u32 [#allocation5], 4
          %s154 = int_to_ptr.vmem [resolvable:$true] %s153
          %159 = dma.hbm_to_vmem [thread:$0]  %s1, 512, %s154, [#allocation6], 128, 128, 8
        $region16: #{tpu_custom_call.1} parent=11 // pred_fallthru
          _
        // Predicated region
        $region17: #{tpu_custom_call.1} parent=11 // pred_check
          %p160 = pneg %p85
        $region18: #{tpu_custom_call.1} parent=11 // pred_check_branch
          %162 = sbr.rel (%p160) target = $region20
        $region19: #{tpu_custom_call.1} parent=11 // pred_region
          _
        $region20: #{tpu_custom_call.1} parent=11 // pred_fallthru
          _
        // Predicated region
        $region21: #{tpu_custom_call.1} parent=11 // pred_check
          %p163 = pneg %p106
        $region22: #{tpu_custom_call.1} parent=11 // pred_check_branch
          %165 = sbr.rel (%p163) target = $region24
        $region23: #{tpu_custom_call.1} parent=11 // pred_region
          _
        $region24: #{tpu_custom_call.1} parent=11 // pred_fallthru
          _
      $region12: #{tpu_custom_call.1} parent=5 // pred_fallthru
        _
      %p166 = scmp.lt.s32.totalorder %s17, 2
      // Predicated region
      $region25: #{tpu_custom_call.1} parent=5 // pred_check
        %p167 = pneg %p166
      $region26: #{tpu_custom_call.1} parent=5 // pred_check_branch
        %169 = sbr.rel (%p167) target = $region28
      $region27: #{tpu_custom_call.1} parent=5 // pred_region
        // Predicated region
        $region29: #{tpu_custom_call.1} parent=27 // pred_check
          %p170 = pneg %p37
        $region30: #{tpu_custom_call.1} parent=27 // pred_check_branch
          %172 = sbr.rel (%p170) target = $region32
        $region31: #{tpu_custom_call.1} parent=27 // pred_region
          %s173 = sand.u32 %s27, 1
          %s174 = scalar_lea.sflag [#allocation3], %s173
          %s175 = sand.u32 %s27, 1
          %s176 = smul.addr %s175, 64
          %s177 = scalar_lea.vmem [#allocation2], %s176
          %s178 = smul.u32 8, %s17
          %s180 = ssub.s32 1024, 1024
          %181 = vsyncadd %s174, %s180
          %s182 = smul.addr %s178, 128
          %s183 = scalar_lea.hbm %s0, %s182
          %s184 = sshll.u32 %s177, 4
          %s185 = int_to_ptr.vmem [resolvable:$true] %s184
          %190 = dma.hbm_to_vmem [thread:$0]  %s183, 1024, %s185, %s174, 128, 128, 8
        $region32: #{tpu_custom_call.1} parent=27 // pred_fallthru
          _
      $region28: #{tpu_custom_call.1} parent=5 // pred_fallthru
        _
      %p191 = scmp.le.s32.totalorder 1, %s17
      %p192 = scmp.lt.s32.totalorder %s17, 3
      %p193 = pnand %p191, %p192
      %p194 = pneg %p193
      // Predicated region
      $region33: #{tpu_custom_call.1} parent=5 // pred_check
        _
      $region34: #{tpu_custom_call.1} parent=5 // pred_check_branch
        %196 = sbr.rel (%p193) target = $region36
      $region35: #{tpu_custom_call.1} parent=5 // pred_region
        %s197 = ssub.s32 %s17, 1
        %s198 = sand.u32 %s30, 1
        %s199 = scalar_lea.sflag [#allocation3], %s198
        %s200 = sand.u32 %s30, 1
        %s201 = smul.addr %s200, 64
        %s202 = scalar_lea.vmem [#allocation2], %s201
        // Predicated region
        $region37: #{tpu_custom_call.1} parent=35 // pred_check
          %p203 = pneg %p43
        $region38: #{tpu_custom_call.1} parent=35 // pred_check_branch
          %205 = sbr.rel (%p203) target = $region40
        $region39: #{tpu_custom_call.1} parent=35 // pred_region
          %206 = dma.done %s199, 1024
        $region40: #{tpu_custom_call.1} parent=35 // pred_fallthru
          _
        // Predicated region
        $region41: #{tpu_custom_call.1} parent=35 // pred_check
          %p207 = pneg %p64
        $region42: #{tpu_custom_call.1} parent=35 // pred_check_branch
          %209 = sbr.rel (%p207) target = $region44
        $region43: #{tpu_custom_call.1} parent=35 // pred_region
          %210 = dma.done [#allocation6], 512
        $region44: #{tpu_custom_call.1} parent=35 // pred_fallthru
          _
        %s211 = sand.u32 %s30, 1
        %s212 = scalar_lea.sflag [#allocation3], %s211
        %s213 = sand.u32 %s30, 1
        %s214 = smul.addr %s213, 64
        %s215 = scalar_lea.vmem [#allocation2], %s214
        %p216 = pneg %p43
        %p217 = pneg %p40
        %p218 = pneg %p64
        %p219 = pneg %p61
        %p220 = pneg %p85
        %p221 = pneg %p82
        %p222 = pneg %p106
        %p223 = pneg %p103
        %p224 = pneg %p132
        %p225 = pneg %p129
        %s226 = sand.u32 %s119, 1
        %s227 = scalar_lea.sflag [#allocation4], %s226
        %s228 = sand.u32 %s119, 1
        %s229 = smul.addr %s228, 8
        %s230 = scalar_lea.vmem [#allocation7], %s229
        %s231 = smul.u32 8, %s22
        %v232 = vld [vmem:[%s202] sm:$0xff]
        %v233 = vld [vmem:[%s202 + $0x8] sm:$0xff]
        %v234 = vld [vmem:[%s202 + $0x10] sm:$0xff]
        %v235 = vld [vmem:[%s202 + $0x18] sm:$0xff]
        %v236 = vld [vmem:[%s202 + $0x20] sm:$0xff]
        %v237 = vld [vmem:[%s202 + $0x28] sm:$0xff]
        %v238 = vld [vmem:[%s202 + $0x30] sm:$0xff]
        %v239 = vld [vmem:[%s202 + $0x38] sm:$0xff]
        %v240 = vld [vmem:[#allocation5] sm:$0xff]
        %v241 = vld [vmem:[#allocation5 + $0x8] sm:$0xff]
        %v242 = vld [vmem:[#allocation5 + $0x10] sm:$0xff]
        %v243 = vld [vmem:[#allocation5 + $0x18] sm:$0xff]
        %v244 = vld [vmem:[%s2] sm:$0x1]
        %v246 = vlaneseq
        %v247 = vshrl.u32 %v246, 7
        %v248 = vsub.s32 0, %v247
        %v249 = vrot.slane %v244, %v248
        %vm251 = vcmask 261120
        %v253 = vsel %vm251, %v232, 0
        %v256 = vsel %vm251, %v233, 0
        %v259 = vsel %vm251, %v234, 0
        %v262 = vsel %vm251, %v235, 0
        %v265 = vsel %vm251, %v236, 0
        %v268 = vsel %vm251, %v237, 0
        %v271 = vsel %vm251, %v238, 0
        %v274 = vsel %vm251, %v239, 0
        %276 = vmatprep.subr.mxu0 0.0
        %277 = vmatpush1.msra.mxu0 %v240
        %278 = vmatprep.subr.mxu0 0.0
        %279 = vmatpush1.msra.mxu0 %v241
        %280 = vmatprep.subr.mxu0 0.0
        %281 = vmatpush1.msra.mxu0 %v242
        %282 = vmatprep.subr.mxu0 0.0
        %283 = vmatpush1.msra.mxu0 %v243
        %284 = vmatprep.subr.mxu0 0.0
        %285 = vmatpush1.msra.mxu0 0.0
        %286 = vmatprep.subr.mxu0 0.0
        %287 = vmatpush1.msra.mxu0 0.0
        %288 = vmatprep.subr.mxu0 0.0
        %289 = vmatpush1.msra.mxu0 0.0
        %290 = vmatprep.subr.mxu0 0.0
        %291 = vmatpush1.msra.mxu0 0.0
        %292 = vmatprep.subr.mxu0 0.0
        %293 = vmatpush1.msra.mxu0 0.0
        %294 = vmatprep.subr.mxu0 0.0
        %295 = vmatpush1.msra.mxu0 0.0
        %296 = vmatprep.subr.mxu0 0.0
        %297 = vmatpush1.msra.mxu0 0.0
        %298 = vmatprep.subr.mxu0 0.0
        %299 = vmatpush1.msra.mxu0 0.0
        %300 = vmatprep.subr.mxu0 0.0
        %301 = vmatpush1.msra.mxu0 0.0
        %302 = vmatprep.subr.mxu0 0.0
        %303 = vmatpush1.msra.mxu0 0.0
        %304 = vmatprep.subr.mxu0 0.0
        %305 = vmatpush1.msra.mxu0 0.0
        %306 = vmatprep.subr.mxu0 0.0
        %307 = vmatpush1.msra.mxu0 0.0
        %308 = vmatprep.subr.mxu0 0.0
        %309 = vmatpush1.msra.mxu0 0.0
        %310 = vmatprep.subr.mxu0 0.0
        %311 = vmatpush1.msra.mxu0 0.0
        %312 = vmatprep.subr.mxu0 0.0
        %313 = vmatpush1.msra.mxu0 0.0
        %314 = vmatprep.subr.mxu0 0.0
        %315 = vmatpush1.msra.mxu0 0.0
        %316 = vmatprep.subr.mxu0 0.0
        %317 = vmatpush1.msra.mxu0 0.0
        %318 = vmatprep.subr.mxu0 0.0
        %319 = vmatpush1.msra.mxu0 0.0
        %320 = vmatprep.subr.mxu0 0.0
        %321 = vmatpush1.msra.mxu0 0.0
        %322 = vmatprep.subr.mxu0 0.0
        %323 = vmatpush1.msra.mxu0 0.0
        %324 = vmatprep.subr.mxu0 0.0
        %325 = vmatpush1.msra.mxu0 0.0
        %326 = vmatprep.subr.mxu0 0.0
        %327 = vmatpush1.msra.mxu0 0.0
        %328 = vmatprep.subr.mxu0 0.0
        %329 = vmatpush1.msra.mxu0 0.0
        %330 = vmatprep.subr.mxu0 0.0
        %331 = vmatpush1.msra.mxu0 0.0
        %332 = vmatprep.subr.mxu0 0.0
        %333 = vmatpush1.msra.mxu0 0.0
        %334 = vmatprep.subr.mxu0 0.0
        %335 = vmatpush1.msra.mxu0 0.0
        %336 = vmatprep.subr.mxu0 0.0
        %337 = vmatpush1.msra.mxu0 0.0
        %338 = vmatprep.subr.mxu0 0.0
        %339 = vmatpush1.msra.mxu0 0.0
        %340 = vmatprep.mubr.f32.mxu0 0.0
        %341 = vmatmul.mubr.f32.gmra.mrb[0].mxu0 %v253
        %v342 = vpop.f32.mrb[0].mxu0
        %v343 = vadd.f32 %v249, %v342
        %v344 = vpop.f32.mrb[0].mxu0
        %345 = vmatprep.mubr.f32.mxu0 0.0
        %346 = vmatmul.mubr.f32.gmra.mrb[0].mxu0 %v256
        %v347 = vpop.f32.mrb[0].mxu0
        %v348 = vadd.f32 %v249, %v347
        %v349 = vpop.f32.mrb[0].mxu0
        %350 = vmatprep.mubr.f32.mxu0 0.0
        %351 = vmatmul.mubr.f32.gmra.mrb[0].mxu0 %v259
        %v352 = vpop.f32.mrb[0].mxu0
        %v353 = vadd.f32 %v249, %v352
        %v354 = vpop.f32.mrb[0].mxu0
        %355 = vmatprep.mubr.f32.mxu0 0.0
        %356 = vmatmul.mubr.f32.gmra.mrb[0].mxu0 %v262
        %v357 = vpop.f32.mrb[0].mxu0
        %v358 = vadd.f32 %v249, %v357
        %v359 = vpop.f32.mrb[0].mxu0
        %360 = vmatprep.mubr.f32.mxu0 0.0
        %361 = vmatmul.mubr.f32.gmra.mrb[0].mxu0 %v265
        %v362 = vpop.f32.mrb[0].mxu0
        %v363 = vadd.f32 %v249, %v362
        %v364 = vpop.f32.mrb[0].mxu0
        %365 = vmatprep.mubr.f32.mxu0 0.0
        %366 = vmatmul.mubr.f32.gmra.mrb[0].mxu0 %v268
        %v367 = vpop.f32.mrb[0].mxu0
        %v368 = vadd.f32 %v249, %v367
        %v369 = vpop.f32.mrb[0].mxu0
        %370 = vmatprep.mubr.f32.mxu0 0.0
        %371 = vmatmul.mubr.f32.gmra.mrb[0].mxu0 %v271
        %v372 = vpop.f32.mrb[0].mxu0
        %v373 = vadd.f32 %v249, %v372
        %v374 = vpop.f32.mrb[0].mxu0
        %375 = vmatprep.mubr.f32.mxu0 0.0
        %376 = vmatmul.mubr.f32.gmra.mrb[0].mxu0 %v274
        %v377 = vpop.f32.mrb[0].mxu0
        %v378 = vadd.f32 %v249, %v377
        %v379 = vpop.f32.mrb[0].mxu0
        %380 = vdwg.mxu0
        %v381 = vtanh.pop %v343
        %v382 = vtanh.pop %v348
        %v383 = vtanh.pop %v353
        %v384 = vtanh.pop %v358
        %v385 = vtanh.pop %v363
        %v386 = vtanh.pop %v368
        %v387 = vtanh.pop %v373
        %v388 = vtanh.pop %v378
        %v389 = vld [vmem:[%s3] sm:$0x1]
        %v391 = vlaneseq
        %v392 = vshrl.u32 %v391, 7
        %v393 = vsub.s32 0, %v392
        %v394 = vrot.slane %v389, %v393
        %v396 = vmul.f32 %v381, %v394
        %v397 = vmul.f32 %v382, %v394
        %v398 = vmul.f32 %v383, %v394
        %v399 = vmul.f32 %v384, %v394
        %v400 = vmul.f32 %v385, %v394
        %v401 = vmul.f32 %v386, %v394
        %v402 = vmul.f32 %v387, %v394
        %v403 = vmul.f32 %v388, %v394
        %v404 = vsel %vm251, %v396, 0.0
        %405 = vadd.xlane.f32.xlu0 %v404
        %v406 = vpop.xlane.xlu0 %405
        %v407 = vsel %vm251, %v397, 0.0
        %408 = vadd.xlane.f32.xlu0 %v407
        %v409 = vpop.xlane.xlu0 %408
        %v410 = vsel %vm251, %v398, 0.0
        %411 = vadd.xlane.f32.xlu0 %v410
        %v412 = vpop.xlane.xlu0 %411
        %v413 = vsel %vm251, %v399, 0.0
        %414 = vadd.xlane.f32.xlu0 %v413
        %v415 = vpop.xlane.xlu0 %414
        %v416 = vsel %vm251, %v400, 0.0
        %417 = vadd.xlane.f32.xlu0 %v416
        %v418 = vpop.xlane.xlu0 %417
        %v419 = vsel %vm251, %v401, 0.0
        %420 = vadd.xlane.f32.xlu0 %v419
        %v421 = vpop.xlane.xlu0 %420
        %v422 = vsel %vm251, %v402, 0.0
        %423 = vadd.xlane.f32.xlu0 %v422
        %v424 = vpop.xlane.xlu0 %423
        %v425 = vsel %vm251, %v403, 0.0
        %426 = vadd.xlane.f32.xlu0 %v425
        %v427 = vpop.xlane.xlu0 %426
        %v428 = vrot.slane %v406, 4
        %v429 = vmax.f32 %v406, %v428
        %v430 = vrot.slane %v429, 2
        %v431 = vmax.f32 %v429, %v430
        %v432 = vrot.slane %v431, 1
        %v433 = vmax.f32 %v431, %v432
        %v434 = vrot.slane %v409, 4
        %v435 = vmax.f32 %v409, %v434
        %v436 = vrot.slane %v435, 2
        %v437 = vmax.f32 %v435, %v436
        %v438 = vrot.slane %v437, 1
        %v439 = vmax.f32 %v437, %v438
        %v440 = vrot.slane %v412, 4
        %v441 = vmax.f32 %v412, %v440
        %v442 = vrot.slane %v441, 2
        %v443 = vmax.f32 %v441, %v442
        %v444 = vrot.slane %v443, 1
        %v445 = vmax.f32 %v443, %v444
        %v446 = vrot.slane %v415, 4
        %v447 = vmax.f32 %v415, %v446
        %v448 = vrot.slane %v447, 2
        %v449 = vmax.f32 %v447, %v448
        %v450 = vrot.slane %v449, 1
        %v451 = vmax.f32 %v449, %v450
        %v452 = vrot.slane %v418, 4
        %v453 = vmax.f32 %v418, %v452
        %v454 = vrot.slane %v453, 2
        %v455 = vmax.f32 %v453, %v454
        %v456 = vrot.slane %v455, 1
        %v457 = vmax.f32 %v455, %v456
        %v458 = vrot.slane %v421, 4
        %v459 = vmax.f32 %v421, %v458
        %v460 = vrot.slane %v459, 2
        %v461 = vmax.f32 %v459, %v460
        %v462 = vrot.slane %v461, 1
        %v463 = vmax.f32 %v461, %v462
        %v464 = vrot.slane %v424, 4
        %v465 = vmax.f32 %v424, %v464
        %v466 = vrot.slane %v465, 2
        %v467 = vmax.f32 %v465, %v466
        %v468 = vrot.slane %v467, 1
        %v469 = vmax.f32 %v467, %v468
        %v470 = vrot.slane %v427, 4
        %v471 = vmax.f32 %v427, %v470
        %v472 = vrot.slane %v471, 2
        %v473 = vmax.f32 %v471, %v472
        %v474 = vrot.slane %v473, 1
        %v475 = vmax.f32 %v473, %v474
        %v476 = vsub.f32 %v406, %v433
        %v477 = vsub.f32 %v409, %v439
        %v478 = vsub.f32 %v412, %v445
        %v479 = vsub.f32 %v415, %v451
        %v480 = vsub.f32 %v418, %v457
        %v481 = vsub.f32 %v421, %v463
        %v482 = vsub.f32 %v424, %v469
        %v483 = vsub.f32 %v427, %v475
        %v484 = vmul.f32 %v476, 1.442695
        %v485 = vpow.pop %v484
        %v486 = vmul.f32 %v477, 1.442695
        %v487 = vpow.pop %v486
        %v488 = vmul.f32 %v478, 1.442695
        %v489 = vpow.pop %v488
        %v490 = vmul.f32 %v479, 1.442695
        %v491 = vpow.pop %v490
        %v492 = vmul.f32 %v480, 1.442695
        %v493 = vpow.pop %v492
        %v494 = vmul.f32 %v481, 1.442695
        %v495 = vpow.pop %v494
        %v496 = vmul.f32 %v482, 1.442695
        %v497 = vpow.pop %v496
        %v498 = vmul.f32 %v483, 1.442695
        %v499 = vpow.pop %v498
        %v500 = vrot.slane %v485, 4
        %v501 = vadd.f32 %v485, %v500
        %v502 = vrot.slane %v501, 2
        %v503 = vadd.f32 %v501, %v502
        %v504 = vrot.slane %v503, 1
        %v505 = vadd.f32 %v503, %v504
        %v506 = vrot.slane %v487, 4
        %v507 = vadd.f32 %v487, %v506
        %v508 = vrot.slane %v507, 2
        %v509 = vadd.f32 %v507, %v508
        %v510 = vrot.slane %v509, 1
        %v511 = vadd.f32 %v509, %v510
        %v512 = vrot.slane %v489, 4
        %v513 = vadd.f32 %v489, %v512
        %v514 = vrot.slane %v513, 2
        %v515 = vadd.f32 %v513, %v514
        %v516 = vrot.slane %v515, 1
        %v517 = vadd.f32 %v515, %v516
        %v518 = vrot.slane %v491, 4
        %v519 = vadd.f32 %v491, %v518
        %v520 = vrot.slane %v519, 2
        %v521 = vadd.f32 %v519, %v520
        %v522 = vrot.slane %v521, 1
        %v523 = vadd.f32 %v521, %v522
        %v524 = vrot.slane %v493, 4
        %v525 = vadd.f32 %v493, %v524
        %v526 = vrot.slane %v525, 2
        %v527 = vadd.f32 %v525, %v526
        %v528 = vrot.slane %v527, 1
        %v529 = vadd.f32 %v527, %v528
        %v530 = vrot.slane %v495, 4
        %v531 = vadd.f32 %v495, %v530
        %v532 = vrot.slane %v531, 2
        %v533 = vadd.f32 %v531, %v532
        %v534 = vrot.slane %v533, 1
        %v535 = vadd.f32 %v533, %v534
        %v536 = vrot.slane %v497, 4
        %v537 = vadd.f32 %v497, %v536
        %v538 = vrot.slane %v537, 2
        %v539 = vadd.f32 %v537, %v538
        %v540 = vrot.slane %v539, 1
        %v541 = vadd.f32 %v539, %v540
        %v542 = vrot.slane %v499, 4
        %v543 = vadd.f32 %v499, %v542
        %v544 = vrot.slane %v543, 2
        %v545 = vadd.f32 %v543, %v544
        %v546 = vrot.slane %v545, 1
        %v547 = vadd.f32 %v545, %v546
        %v548 = vrcp.pop %v505
        %v549 = vmul.f32 %v485, %v548
        %v550 = vrcp.pop %v511
        %v551 = vmul.f32 %v487, %v550
        %v552 = vrcp.pop %v517
        %v553 = vmul.f32 %v489, %v552
        %v554 = vrcp.pop %v523
        %v555 = vmul.f32 %v491, %v554
        %v556 = vrcp.pop %v529
        %v557 = vmul.f32 %v493, %v556
        %v558 = vrcp.pop %v535
        %v559 = vmul.f32 %v495, %v558
        %v560 = vrcp.pop %v541
        %v561 = vmul.f32 %v497, %v560
        %v562 = vrcp.pop %v547
        %v563 = vmul.f32 %v499, %v562
        %v564 = vmul.f32 %v549, %v232
        %v565 = vmul.f32 %v551, %v233
        %v566 = vmul.f32 %v553, %v234
        %v567 = vmul.f32 %v555, %v235
        %v568 = vmul.f32 %v557, %v236
        %v569 = vmul.f32 %v559, %v237
        %v570 = vmul.f32 %v561, %v238
        %v571 = vmul.f32 %v563, %v239
        %v572 = vsel %vm251, %v564, 0.0
        %v573 = vrot.slane %v572, 4
        %v574 = vadd.f32 %v572, %v573
        %v575 = vrot.slane %v574, 2
        %v576 = vadd.f32 %v574, %v575
        %v577 = vrot.slane %v576, 1
        %v578 = vadd.f32 %v576, %v577
        %v579 = vsel %vm251, %v565, 0.0
        %v580 = vrot.slane %v579, 4
        %v581 = vadd.f32 %v579, %v580
        %v582 = vrot.slane %v581, 2
        %v583 = vadd.f32 %v581, %v582
        %v584 = vrot.slane %v583, 1
        %v585 = vadd.f32 %v583, %v584
        %v586 = vsel %vm251, %v566, 0.0
        %v587 = vrot.slane %v586, 4
        %v588 = vadd.f32 %v586, %v587
        %v589 = vrot.slane %v588, 2
        %v590 = vadd.f32 %v588, %v589
        %v591 = vrot.slane %v590, 1
        %v592 = vadd.f32 %v590, %v591
        %v593 = vsel %vm251, %v567, 0.0
        %v594 = vrot.slane %v593, 4
        %v595 = vadd.f32 %v593, %v594
        %v596 = vrot.slane %v595, 2
        %v597 = vadd.f32 %v595, %v596
        %v598 = vrot.slane %v597, 1
        %v599 = vadd.f32 %v597, %v598
        %v600 = vsel %vm251, %v568, 0.0
        %v601 = vrot.slane %v600, 4
        %v602 = vadd.f32 %v600, %v601
        %v603 = vrot.slane %v602, 2
        %v604 = vadd.f32 %v602, %v603
        %v605 = vrot.slane %v604, 1
        %v606 = vadd.f32 %v604, %v605
        %v607 = vsel %vm251, %v569, 0.0
        %v608 = vrot.slane %v607, 4
        %v609 = vadd.f32 %v607, %v608
        %v610 = vrot.slane %v609, 2
        %v611 = vadd.f32 %v609, %v610
        %v612 = vrot.slane %v611, 1
        %v613 = vadd.f32 %v611, %v612
        %v614 = vsel %vm251, %v570, 0.0
        %v615 = vrot.slane %v614, 4
        %v616 = vadd.f32 %v614, %v615
        %v617 = vrot.slane %v616, 2
        %v618 = vadd.f32 %v616, %v617
        %v619 = vrot.slane %v618, 1
        %v620 = vadd.f32 %v618, %v619
        %v621 = vsel %vm251, %v571, 0.0
        %v622 = vrot.slane %v621, 4
        %v623 = vadd.f32 %v621, %v622
        %v624 = vrot.slane %v623, 2
        %v625 = vadd.f32 %v623, %v624
        %v626 = vrot.slane %v625, 1
        %v627 = vadd.f32 %v625, %v626
        %vm636 = vcmask 1041409
        %v637 = vsel %vm636, %v585, %v578
        %vm638 = vcmask 1042434
        %v639 = vsel %vm638, %v592, %v637
        %vm640 = vcmask 1043459
        %v641 = vsel %vm640, %v599, %v639
        %vm642 = vcmask 1044484
        %v643 = vsel %vm642, %v606, %v641
        %vm644 = vcmask 1045509
        %v645 = vsel %vm644, %v613, %v643
        %vm646 = vcmask 1046534
        %v647 = vsel %vm646, %v620, %v645
        %vm648 = vcmask 1047559
        %v649 = vsel %vm648, %v627, %v647
        %651 = vst.msk [vmem:[%s230] sm:$0xff] %vm251, %v649
        %s652 = sand.u32 %s119, 1
        %s653 = scalar_lea.sflag [#allocation4], %s652
        %s654 = sand.u32 %s119, 1
        %s655 = smul.addr %s654, 8
        %s656 = scalar_lea.vmem [#allocation7], %s655
        // Predicated region
        $region45: #{tpu_custom_call.1} parent=35 // pred_check
          %p657 = pneg %p129
        $region46: #{tpu_custom_call.1} parent=35 // pred_check_branch
          %659 = sbr.rel (%p657) target = $region48
        $region47: #{tpu_custom_call.1} parent=35 // pred_region
          %s661 = ssub.s32 128, 128
          %662 = vsyncadd %s653, %s661
          %s663 = smul.addr %s22, 128
          %s664 = scalar_lea.hbm %s4, %s663
          %s666 = sshll.u32 %s656, 4
          %s667 = int_to_ptr.vmem [resolvable:$true] %s666
          %669 = dma.vmem_to_hbm [thread:$0]  %s667, 128, %s664, %s653
        $region48: #{tpu_custom_call.1} parent=35 // pred_fallthru
          _
      $region36: #{tpu_custom_call.1} parent=5 // pred_fallthru
        _
      %p670 = scmp.le.s32.totalorder 2, %s17
      // Predicated region
      $region49: #{tpu_custom_call.1} parent=5 // pred_check
        %p671 = pneg %p670
      $region50: #{tpu_custom_call.1} parent=5 // pred_check_branch
        %673 = sbr.rel (%p671) target = $region52
      $region51: #{tpu_custom_call.1} parent=5 // pred_region
        %s674 = ssub.s32 %s17, 2
        // Predicated region
        $region53: #{tpu_custom_call.1} parent=51 // pred_check
          %p675 = pneg %p135
        $region54: #{tpu_custom_call.1} parent=51 // pred_check_branch
          %677 = sbr.rel (%p675) target = $region56
        $region55: #{tpu_custom_call.1} parent=51 // pred_region
          %s678 = sand.u32 %s120, 1
          %s679 = scalar_lea.sflag [#allocation4], %s678
          %s680 = sand.u32 %s120, 1
          %s681 = smul.addr %s680, 8
          %s682 = scalar_lea.vmem [#allocation7], %s681
          %683 = dma.done %s679, 128
        $region56: #{tpu_custom_call.1} parent=51 // pred_fallthru
          _
      $region52: #{tpu_custom_call.1} parent=5 // pred_fallthru
        _
    $region6: #{tpu_custom_call.1} parent=1 // loop_footer
      %s21 = sadd.s32 1, %s17
    $region7: #{tpu_custom_call.1} parent=1 // loop_footer_branch
      %16 = sbr.rel target = $region3
    $region8: #{tpu_custom_call.1} parent=1 // loop_exit
      _
    %684 = vsyncpa [#allocation3], 1
    %s685 = scalar_lea.sflag [#allocation3], 1
    %686 = vsyncpa %s685, 1
    %687 = vsyncpa [#allocation6], 1
    %688 = vsyncpa [#allocation4], 1
    %s689 = scalar_lea.sflag [#allocation4], 1
    %690 = vsyncpa %s689, 1

</llo_original>
